<compile_context>
chip_gen: v7x
topology: tpu7x:2x2x1
jax: 0.10.0
libtpu: 0.0.40
codegen_flags: <defaults>
</compile_context>

<pallas_src>
import dataclasses
import functools

import jax
import jax.numpy as jnp
from jax.experimental import pallas as pl
from jax.experimental.pallas import tpu as pltpu


# --------------------------------------------------------------------------
# Helpers
# --------------------------------------------------------------------------
def _round_up(x: int, m: int) -> int:
    return ((x + m - 1) // m) * m


def _cdiv(a: int, b: int) -> int:
    return (a + b - 1) // b


def _default_tile_rows() -> int:
    """Generation-tuned rows per grid step (original rows, f32 streaming).

    Footprints (double-buffered, worst case with-edge) stay under the scoped
    VMEM defaults on every generation, so no vmem_limit_bytes override needed:
      v5e  8192 rows  ~4.5 MiB   (16 MiB default)
      v6e 16384 rows  ~9.5 MiB   (32 MiB default)
      v7x 32768 rows ~19.0 MiB   (32 MiB default)
    """
    try:
        kind = jax.devices()[0].device_kind.lower()
    except Exception:
        return 16384
    if "v5" in kind:
        return 8192
    if "v7" in kind:
        return 32768
    return 16384  # v6e / unknown


def _pick_tile(n_rows: int, max_tile_rows: int) -> int:
    """Rows per grid step along the (possibly folded) row axis."""
    if n_rows <= 32:
        return n_rows                      # single full-extent block is legal
    max_tile_rows = max((max_tile_rows // 16) * 16, 16)
    # Keep >= 2 grid steps (v7x has two TensorCores) with a 16-aligned tile.
    return min(max_tile_rows, _round_up(_cdiv(n_rows, 2), 16))


def _block_diag(w: jax.Array, fold: int) -> jax.Array:
    """[k, m] -> [fold*k, fold*m] block-diagonal with diagonal blocks == w."""
    k, m = w.shape
    eye = jnp.eye(fold, dtype=w.dtype)
    return (eye[:, None, :, None] * w[None, :, None, :]).reshape(fold * k,
                                                                 fold * m)


# --------------------------------------------------------------------------
# Pallas kernels (bf16 MXU operands, f32 accumulation / bias / relu)
# --------------------------------------------------------------------------
def _message_edge_kernel(v_ref, e_ref, wv_ref, we_ref, b_ref, o_ref):
    # o = relu(v @ Wv + e @ We + b)  ==  relu(concat([v, e]) @ W + b)
    v = v_ref[...].astype(jnp.bfloat16)
    e = e_ref[...].astype(jnp.bfloat16)
    acc = jnp.dot(v, wv_ref[...], preferred_element_type=jnp.float32)
    acc = acc + jnp.dot(e, we_ref[...], preferred_element_type=jnp.float32)
    acc = acc + b_ref[...]
    o_ref[...] = jnp.maximum(acc, 0.0).astype(o_ref.dtype)


def _message_no_edge_kernel(v_ref, wv_ref, b_ref, o_ref):
    # o = relu(v @ Wv + b)
    v = v_ref[...].astype(jnp.bfloat16)
    acc = jnp.dot(v, wv_ref[...], preferred_element_type=jnp.float32)
    acc = acc + b_ref[...]
    o_ref[...] = jnp.maximum(acc, 0.0).astype(o_ref.dtype)


# --------------------------------------------------------------------------
# Wrappers calling pallas_call
# --------------------------------------------------------------------------
@functools.partial(jax.jit, static_argnames=("tile_n",))
def message_with_edge(vertices, edges, w_v, w_e, bias, *, tile_n=None):
    n, vd = vertices.shape
    ed = edges.shape[1]
    md = w_v.shape[1]
    out_dtype = vertices.dtype
    if tile_n is None:
        tile_n = _default_tile_rows()

    # Weights / bias are tiny and grid-resident: pre-cast once.
    wv = w_v.astype(jnp.bfloat16)
    we = w_e.astype(jnp.bfloat16)
    b = bias.reshape(1, md).astype(jnp.float32)

    # Lane-dense fold: [N,d] -> [N/4, 4d] row-major reshapes are bitcasts, so
    # the output last dim becomes 4*md (128 for md=32) at zero extra HBM
    # traffic; the weights become block-diagonal.
    fold = 4 if (n % 4 == 0 and n >= 4 and md < 128) else 1
    if fold > 1:
        v_in = vertices.reshape(n // fold, fold * vd)
        e_in = edges.reshape(n // fold, fold * ed)
        wv = _block_diag(wv, fold)
        we = _block_diag(we, fold)
        b = jnp.tile(b, (1, fold))
    else:
        v_in, e_in = vertices, edges

    n_rows = n // fold
    vdf, edf, mdf = fold * vd, fold * ed, fold * md

    tile = _pick_tile(n_rows, max(tile_n // fold, 16))
    grid = (_cdiv(n_rows, tile),)

    flops = 2 * n * (vd + ed) * md
    bytes_accessed = (vertices.dtype.itemsize * n * vd
                      + edges.dtype.itemsize * n * ed
                      + jnp.dtype(out_dtype).itemsize * n * md
                      + 2 * (vdf * mdf + edf * mdf) + 4 * mdf)

    return pl.pallas_call(
        _message_edge_kernel,
        out_shape=jax.ShapeDtypeStruct((n_rows, mdf), out_dtype),
        grid=grid,
        in_specs=[
            pl.BlockSpec((tile, vdf), lambda i: (i, 0)),   # vertices tile
            pl.BlockSpec((tile, edf), lambda i: (i, 0)),   # edges tile
            pl.BlockSpec((vdf, mdf), lambda i: (0, 0)),    # W_v (resident)
            pl.BlockSpec((edf, mdf), lambda i: (0, 0)),    # W_e (resident)
            pl.BlockSpec((1, mdf), lambda i: (0, 0)),      # bias (resident)
        ],
        out_specs=pl.BlockSpec((tile, mdf), lambda i: (i, 0)),
        compiler_params=pltpu.CompilerParams(
            dimension_semantics=("parallel",)),
        cost_estimate=pl.CostEstimate(
            flops=flops, transcendentals=0, bytes_accessed=bytes_accessed),
    )(v_in, e_in, wv, we, b).reshape(n, md)


@functools.partial(jax.jit, static_argnames=("tile_n",))
def message_without_edge(vertices, w_v, bias, *, tile_n=None):
    n, vd = vertices.shape
    md = w_v.shape[1]
    out_dtype = vertices.dtype
    if tile_n is None:
        tile_n = _default_tile_rows()

    wv = w_v.astype(jnp.bfloat16)
    b = bias.reshape(1, md).astype(jnp.float32)

    fold = 4 if (n % 4 == 0 and n >= 4 and md < 128) else 1
    if fold > 1:
        v_in = vertices.reshape(n // fold, fold * vd)
        wv = _block_diag(wv, fold)
        b = jnp.tile(b, (1, fold))
    else:
        v_in = vertices

    n_rows = n // fold
    vdf, mdf = fold * vd, fold * md

    tile = _pick_tile(n_rows, max(tile_n // fold, 16))
    grid = (_cdiv(n_rows, tile),)

    flops = 2 * n * vd * md
    bytes_accessed = (vertices.dtype.itemsize * n * vd
                      + jnp.dtype(out_dtype).itemsize * n * md
                      + 2 * vdf * mdf + 4 * mdf)

    return pl.pallas_call(
        _message_no_edge_kernel,
        out_shape=jax.ShapeDtypeStruct((n_rows, mdf), out_dtype),
        grid=grid,
        in_specs=[
            pl.BlockSpec((tile, vdf), lambda i: (i, 0)),
            pl.BlockSpec((vdf, mdf), lambda i: (0, 0)),
            pl.BlockSpec((1, mdf), lambda i: (0, 0)),
        ],
        out_specs=pl.BlockSpec((tile, mdf), lambda i: (i, 0)),
        compiler_params=pltpu.CompilerParams(
            dimension_semantics=("parallel",)),
        cost_estimate=pl.CostEstimate(
            flops=flops, transcendentals=0, bytes_accessed=bytes_accessed),
    )(v_in, wv, b).reshape(n, md)


# --------------------------------------------------------------------------
# Module-equivalent wrapper (mirrors Message.__init__ / forward dispatch)
# --------------------------------------------------------------------------
@dataclasses.dataclass
class MessageConfig:
    hidden_dim: int = 32
    edge_dim: int = 8
    message_dim: int = 32


class MessagePallas:
    def __init__(self, config: MessageConfig, key: jax.Array):
        self.config = config
        self.vertex_dim = config.hidden_dim
        self.edge_dim = config.edge_dim
        self.message_dim = config.message_dim

        k1, k2, k3 = jax.random.split(key, 3)
        in_dim = self.vertex_dim + self.edge_dim
        scale = 1.0 / jnp.sqrt(jnp.float32(max(in_dim, 1)))
        # Split weight: concat([v, e]) @ W  ==  v @ W_v + e @ W_e
        self.w_v = (scale * jax.random.normal(
            k1, (self.vertex_dim, self.message_dim))).astype(jnp.float32)
        self.w_e = (scale * jax.random.normal(
            k2, (max(self.edge_dim, 1), self.message_dim))).astype(jnp.float32)
        self.bias = (scale * jax.random.normal(
            k3, (1, self.message_dim))).astype(jnp.float32)

    def __call__(self, *args):
        if self.config.edge_dim == 0:
            return self._forward_without_edge(*args)
        else:
            return self._forward_with_edge(*args)

    def _forward_with_edge(self, vertices, edges):
        return message_with_edge(vertices, edges, self.w_v, self.w_e, self.bias)

    def _forward_without_edge(self, vertices):
        return message_without_edge(vertices, self.w_v, self.bias)


# --------------------------------------------------------------------------
# Pure-JAX f32 references
# --------------------------------------------------------------------------
def _ref_with_edge(vertices, edges, w_v, w_e, bias):
    return jnp.maximum(vertices @ w_v + edges @ w_e + bias, 0.0)


def _ref_without_edge(vertices, w_v, bias):
    return jnp.maximum(vertices @ w_v + bias, 0.0)


if __name__ == "__main__":
    key = jax.random.PRNGKey(0)
    k_param, k_v, k_e, k_v2, k_param0, k_v0 = jax.random.split(key, 6)

    cfg = MessageConfig(hidden_dim=32, edge_dim=8, message_dim=32)
    msg_mod = MessagePallas(cfg, k_param)

    # (a) ragged N (not a multiple of 4): plain layout + partial last block.
    n1 = 130
    v1 = jax.random.normal(k_v, (n1, cfg.hidden_dim), dtype=jnp.float32)
    e1 = jax.random.normal(k_e, (n1, cfg.edge_dim), dtype=jnp.float32)
    out1 = jax.block_until_ready(msg_mod(v1, e1))
    ref1 = _ref_with_edge(v1, e1, msg_mod.w_v, msg_mod.w_e, msg_mod.bias)
    assert out1.shape == (n1, cfg.message_dim)
    assert out1.dtype == jnp.float32
    assert jnp.allclose(out1, ref1, atol=5e-2, rtol=5e-2)

    # (b) N % 4 == 0: lane-dense fold-by-4 path.
    n2 = 512
    v2 = jax.random.normal(k_v2, (n2, cfg.hidden_dim), dtype=jnp.float32)
    e2 = jax.random.normal(k_e, (n2, cfg.edge_dim), dtype=jnp.float32)
    out2 = jax.block_until_ready(msg_mod(v2, e2))
    ref2 = _ref_with_edge(v2, e2, msg_mod.w_v, msg_mod.w_e, msg_mod.bias)
    assert out2.shape == (n2, cfg.message_dim)
    assert jnp.allclose(out2, ref2, atol=5e-2, rtol=5e-2)

    # (c) edge_dim == 0 dispatch (folded path).
    cfg0 = MessageConfig(hidden_dim=32, edge_dim=0, message_dim=32)
    msg_mod0 = MessagePallas(cfg0, k_param0)
    n3 = 256
    v3 = jax.random.normal(k_v0, (n3, cfg0.hidden_dim), dtype=jnp.float32)
    out3 = jax.block_until_ready(msg_mod0(v3))
    ref3 = _ref_without_edge(v3, msg_mod0.w_v, msg_mod0.bias)
    assert out3.shape == (n3, cfg0.message_dim)
    assert jnp.allclose(out3, ref3, atol=5e-2, rtol=5e-2)

    print("KERNEL_OK")
</pallas_src>

<mosaic_0001>
module attributes {stable_mosaic.version = 11 : i64} {
  func.func @_message_edge_kernel(%arg0: i32, %arg1: memref<80x32xf32, #tpu.memory_space<vmem>>, %arg2: memref<80x8xf32, #tpu.memory_space<vmem>>, %arg3: memref<32x32xbf16, #tpu.memory_space<vmem>>, %arg4: memref<8x32xbf16, #tpu.memory_space<vmem>>, %arg5: memref<1x32xf32, #tpu.memory_space<vmem>>, %arg6: memref<80x32xf32, #tpu.memory_space<vmem>>) attributes {dimension_semantics = [#tpu.dimension_semantics<parallel>], iteration_bounds = array<i64: 2>, scalar_prefetch = 0 : i64, scratch_operands = 0 : i64, tpu.core_type = #tpu.core_type<tc>, window_params = [{transform_indices = @transform_0, window_bounds = array<i64: 80, 32>}, {transform_indices = @transform_1, window_bounds = array<i64: 80, 8>}, {pipeline_mode = #tpu.pipeline_mode<synchronous>, transform_indices = @transform_2, window_bounds = array<i64: 32, 32>}, {pipeline_mode = #tpu.pipeline_mode<synchronous>, transform_indices = @transform_3, window_bounds = array<i64: 8, 32>}, {pipeline_mode = #tpu.pipeline_mode<synchronous>, transform_indices = @transform_4, window_bounds = array<i64: 1, 32>}, {transform_indices = @transform_5, window_bounds = array<i64: 80, 32>}]} {
    %c0 = arith.constant 0 : index
    %c0_0 = arith.constant 0 : index
    %0 = vector.load %arg1[%c0, %c0_0] : memref<80x32xf32, #tpu.memory_space<vmem>>, vector<80x32xf32>
    %1 = arith.truncf %0 : vector<80x32xf32> to vector<80x32xbf16>
    %c0_1 = arith.constant 0 : index
    %c0_2 = arith.constant 0 : index
    %2 = vector.load %arg2[%c0_1, %c0_2] : memref<80x8xf32, #tpu.memory_space<vmem>>, vector<80x8xf32>
    %3 = arith.truncf %2 : vector<80x8xf32> to vector<80x8xbf16>
    %c0_3 = arith.constant 0 : index
    %c0_4 = arith.constant 0 : index
    %4 = vector.load %arg3[%c0_3, %c0_4] : memref<32x32xbf16, #tpu.memory_space<vmem>>, vector<32x32xbf16>
    %cst = arith.constant dense<0.000000e+00> : vector<80x32xf32>
    %5 = tpu.matmul %1, %4, %cst {dimension_numbers = #tpu.dot_dimension_numbers<[1], [0], [0], [1], [0, 0, 1, 1], [], []>} : vector<80x32xbf16>, vector<32x32xbf16>, vector<80x32xf32> -> vector<80x32xf32>
    %c0_5 = arith.constant 0 : index
    %c0_6 = arith.constant 0 : index
    %6 = vector.load %arg4[%c0_5, %c0_6] : memref<8x32xbf16, #tpu.memory_space<vmem>>, vector<8x32xbf16>
    %cst_7 = arith.constant dense<0.000000e+00> : vector<80x32xf32>
    %7 = tpu.matmul %3, %6, %cst_7 {dimension_numbers = #tpu.dot_dimension_numbers<[1], [0], [0], [1], [0, 0, 1, 1], [], []>} : vector<80x8xbf16>, vector<8x32xbf16>, vector<80x32xf32> -> vector<80x32xf32>
    %8 = arith.addf %5, %7 : vector<80x32xf32>
    %c0_8 = arith.constant 0 : index
    %c0_9 = arith.constant 0 : index
    %9 = vector.load %arg5[%c0_8, %c0_9] : memref<1x32xf32, #tpu.memory_space<vmem>>, vector<1x32xf32>
    %10 = vector.broadcast %9 : vector<1x32xf32> to vector<80x32xf32>
    %11 = arith.addf %8, %10 : vector<80x32xf32>
    %cst_10 = arith.constant 0.000000e+00 : f32
    %12 = vector.broadcast %cst_10 : f32 to vector<80x32xf32>
    %13 = arith.maximumf %11, %12 : vector<80x32xf32>
    %c0_11 = arith.constant 0 : index
    %c0_12 = arith.constant 0 : index
    %14 = vector.load %arg6[%c0_11, %c0_12] : memref<80x32xf32, #tpu.memory_space<vmem>>, vector<80x32xf32>
    tpu.vector_store %arg6[%c0_11, %c0_12], %13 {strides = array<i32>} : memref<80x32xf32, #tpu.memory_space<vmem>>, vector<80x32xf32>,
    return
  }
  func.func @transform_0(%arg0: i32) -> (i32, i32) {
    %c0_i32 = arith.constant 0 : i32
    %c0_i32_0 = arith.constant 0 : i32
    return %arg0, %c0_i32 : i32, i32
  }
  func.func @transform_1(%arg0: i32) -> (i32, i32) {
    %c0_i32 = arith.constant 0 : i32
    %c0_i32_0 = arith.constant 0 : i32
    return %arg0, %c0_i32 : i32, i32
  }
  func.func @transform_2(%arg0: i32) -> (i32, i32) {
    %c0_i32 = arith.constant 0 : i32
    %c0_i32_0 = arith.constant 0 : i32
    %c0_i32_1 = arith.constant 0 : i32
    return %c0_i32, %c0_i32_0 : i32, i32
  }
  func.func @transform_3(%arg0: i32) -> (i32, i32) {
    %c0_i32 = arith.constant 0 : i32
    %c0_i32_0 = arith.constant 0 : i32
    %c0_i32_1 = arith.constant 0 : i32
    return %c0_i32, %c0_i32_0 : i32, i32
  }
  func.func @transform_4(%arg0: i32) -> (i32, i32) {
    %c0_i32 = arith.constant 0 : i32
    %c0_i32_0 = arith.constant 0 : i32
    %c0_i32_1 = arith.constant 0 : i32
    return %c0_i32, %c0_i32_0 : i32, i32
  }
  func.func @transform_5(%arg0: i32) -> (i32, i32) {
    %c0_i32 = arith.constant 0 : i32
    %c0_i32_0 = arith.constant 0 : i32
    return %arg0, %c0_i32 : i32, i32
  }
}

</mosaic_0001>

<llo_original>
// kernel: message_with_edge.1
$region0: #{message_with_edge.1}
  #allocation0 [shape = 'u32[]', space=smem, size = 0x4, offset = 0x4, fixed_abs, tag = 'smem constant byte address 0x4 - core index']
  #allocation1 [shape = 'u32[144,128]{1,0:T(1,128)}', space=vmem, size = 0x12000, scoped, tag = 'internal scratch']
  %s0 = inlined_call_operand.vmem [shape: f32[130,32], index: 0, kind: input, shape index: {}]
  %s1 = inlined_call_operand.vmem [shape: f32[130,8], index: 1, kind: input, shape index: {}]
  %s2 = inlined_call_operand.vmem [shape: bf16[32,32], index: 2, kind: input, shape index: {}]
  %s3 = inlined_call_operand.vmem [shape: bf16[8,32], index: 3, kind: input, shape index: {}]
  %s4 = inlined_call_operand.vmem [shape: f32[1,32], index: 4, kind: input, shape index: {}]
  %s5 = inlined_call_operand.vmem [shape: f32[130,32], index: 5, kind: output, shape index: {}]
  %s6 = sld [smem:[#allocation0]]
  $region101: #{message_with_edge.1} parent=0
    _
  %s8 = ssub.s32 1, %s6
  %s9 = scalar_select 0, %s8, %s6
  $region1: #{message_with_edge.1} parent=0
    #allocation2 [shape = 'u8[81920]{0}', space=vmem, size = 0x14000, scoped, tag = 'output window, operand 0']
    loop: start=0, step=1, limit=4
    $region2: #{message_with_edge.1} parent=1 // loop_pre_header
      _
    $region3: #{message_with_edge.1} parent=1 // loop_header
      %s11 = sphi 0, %s15
      %p12 = scmp.ge.s32.totalorder %s11, 4
      %s21 = sphi 0, %s23
      %s24 = sphi 0, %s21
      %s25 = sphi 0, %s24
      %s41 = sphi 0, %s25
      %s47 = sphi 0, %s49
      %s50 = sphi 0, %s47
      %s51 = sphi 0, %s50
      %s67 = sphi 0, %s51
      %s71 = sphi 0, %s71
      %s73 = sphi 0, %s71
      %s74 = sphi 0, %s73
      %s88 = sphi 0, %s74
      %s92 = sphi 0, %s92
      %s94 = sphi 0, %s92
      %s95 = sphi 0, %s94
      %s109 = sphi 0, %s95
      %s113 = sphi 0, %s113
      %s115 = sphi 0, %s113
      %s116 = sphi 0, %s115
      %s130 = sphi 0, %s116
      %s136 = sphi 0, %s138
      %s139 = sphi 0, %s136
      %s140 = sphi 0, %s139
      %s156 = sphi 0, %s140
    $region4: #{message_with_edge.1} parent=1 // loop_header_branch
      %14 = sbr.rel (%p12) target = $region8
    $region5: #{message_with_edge.1} parent=1 // loop_body
      %s16 = ssub.s32 %s11, 1
      %s17 = ssub.s32 %s11, 2
      %s18 = sadd.s32 %s11, 1
      %s19 = ssub.s32 %s11, %s18
      %p20 = scmp.eq.s32.totalorder %s19, 0
      %s22 = sadd.s32 %s21, 1
      %s23 = scalar_select %p20, %s21, %s22
      %p26 = pneg %p20
      %p27 = scmp.eq.s32.totalorder %s11, 1
      %p28 = por %p26, %p27
      %p29 = scmp.ne.s32.totalorder %s21, %s24
      %p30 = scmp.eq.s32.totalorder %s11, 0
      %p31 = por %p29, %p30
      %p32 = scmp.ne.s32.totalorder %s21, %s24
      %p33 = scmp.eq.s32.totalorder %s16, 1
      %p34 = por %p32, %p33
      %p35 = scmp.ne.s32.totalorder %s24, %s25
      %p36 = scmp.eq.s32.totalorder %s16, 0
      %p37 = por %p35, %p36
      %p38 = scmp.ne.s32.totalorder %s24, %s25
      %p39 = scmp.eq.s32.totalorder %s17, 1
      %p40 = por %p38, %p39
      %p42 = scmp.ne.s32.totalorder %s25, %s41
      %p43 = scmp.eq.s32.totalorder %s17, 0
      %p44 = por %p42, %p43
      %s45 = ssub.s32 %s11, %s18
      %p46 = scmp.eq.s32.totalorder %s45, 0
      %s48 = sadd.s32 %s47, 1
      %s49 = scalar_select %p46, %s47, %s48
      %p52 = pneg %p46
      %p53 = scmp.eq.s32.totalorder %s11, 1
      %p54 = por %p52, %p53
      %p55 = scmp.ne.s32.totalorder %s47, %s50
      %p56 = scmp.eq.s32.totalorder %s11, 0
      %p57 = por %p55, %p56
      %p58 = scmp.ne.s32.totalorder %s47, %s50
      %p59 = scmp.eq.s32.totalorder %s16, 1
      %p60 = por %p58, %p59
      %p61 = scmp.ne.s32.totalorder %s50, %s51
      %p62 = scmp.eq.s32.totalorder %s16, 0
      %p63 = por %p61, %p62
      %p64 = scmp.ne.s32.totalorder %s50, %s51
      %p65 = scmp.eq.s32.totalorder %s17, 1
      %p66 = por %p64, %p65
      %p68 = scmp.ne.s32.totalorder %s51, %s67
      %p69 = scmp.eq.s32.totalorder %s17, 0
      %p70 = por %p68, %p69
      %s72 = sadd.s32 %s71, 1
      %p75 = scmp.eq.s32.totalorder %s11, 1
      %p76 = scmp.ne.s32.totalorder %s71, %s73
      %p77 = scmp.eq.s32.totalorder %s11, 0
      %p78 = por %p76, %p77
      %p79 = scmp.ne.s32.totalorder %s71, %s73
      %p80 = scmp.eq.s32.totalorder %s16, 1
      %p81 = por %p79, %p80
      %p82 = scmp.ne.s32.totalorder %s73, %s74
      %p83 = scmp.eq.s32.totalorder %s16, 0
      %p84 = por %p82, %p83
      %p85 = scmp.ne.s32.totalorder %s73, %s74
      %p86 = scmp.eq.s32.totalorder %s17, 1
      %p87 = por %p85, %p86
      %p89 = scmp.ne.s32.totalorder %s74, %s88
      %p90 = scmp.eq.s32.totalorder %s17, 0
      %p91 = por %p89, %p90
      %s93 = sadd.s32 %s92, 1
      %p96 = scmp.eq.s32.totalorder %s11, 1
      %p97 = scmp.ne.s32.totalorder %s92, %s94
      %p98 = scmp.eq.s32.totalorder %s11, 0
      %p99 = por %p97, %p98
      %p100 = scmp.ne.s32.totalorder %s92, %s94
      %p101 = scmp.eq.s32.totalorder %s16, 1
      %p102 = por %p100, %p101
      %p103 = scmp.ne.s32.totalorder %s94, %s95
      %p104 = scmp.eq.s32.totalorder %s16, 0
      %p105 = por %p103, %p104
      %p106 = scmp.ne.s32.totalorder %s94, %s95
      %p107 = scmp.eq.s32.totalorder %s17, 1
      %p108 = por %p106, %p107
      %p110 = scmp.ne.s32.totalorder %s95, %s109
      %p111 = scmp.eq.s32.totalorder %s17, 0
      %p112 = por %p110, %p111
      %s114 = sadd.s32 %s113, 1
      %p117 = scmp.eq.s32.totalorder %s11, 1
      %p118 = scmp.ne.s32.totalorder %s113, %s115
      %p119 = scmp.eq.s32.totalorder %s11, 0
      %p120 = por %p118, %p119
      %p121 = scmp.ne.s32.totalorder %s113, %s115
      %p122 = scmp.eq.s32.totalorder %s16, 1
      %p123 = por %p121, %p122
      %p124 = scmp.ne.s32.totalorder %s115, %s116
      %p125 = scmp.eq.s32.totalorder %s16, 0
      %p126 = por %p124, %p125
      %p127 = scmp.ne.s32.totalorder %s115, %s116
      %p128 = scmp.eq.s32.totalorder %s17, 1
      %p129 = por %p127, %p128
      %p131 = scmp.ne.s32.totalorder %s116, %s130
      %p132 = scmp.eq.s32.totalorder %s17, 0
      %p133 = por %p131, %p132
      %s134 = ssub.s32 %s11, %s18
      %p135 = scmp.eq.s32.totalorder %s134, 0
      %s137 = sadd.s32 %s136, 1
      %s138 = scalar_select %p135, %s136, %s137
      %p141 = pneg %p135
      %p142 = scmp.eq.s32.totalorder %s11, 1
      %p143 = por %p141, %p142
      %p144 = scmp.ne.s32.totalorder %s136, %s139
      %p145 = scmp.eq.s32.totalorder %s11, 0
      %p146 = por %p144, %p145
      %p147 = scmp.ne.s32.totalorder %s136, %s139
      %p148 = scmp.eq.s32.totalorder %s16, 1
      %p149 = por %p147, %p148
      %p150 = scmp.ne.s32.totalorder %s139, %s140
      %p151 = scmp.eq.s32.totalorder %s16, 0
      %p152 = por %p150, %p151
      %p153 = scmp.ne.s32.totalorder %s139, %s140
      %p154 = scmp.eq.s32.totalorder %s17, 1
      %p155 = por %p153, %p154
      %p157 = scmp.ne.s32.totalorder %s140, %s156
      %p158 = scmp.eq.s32.totalorder %s17, 0
      %p159 = por %p157, %p158
      %p160 = scmp.le.s32.totalorder 1, %s11
      %p161 = scmp.lt.s32.totalorder %s11, 3
      %p162 = pnand %p160, %p161
      %p163 = pneg %p162
      // Predicated region
      $region9: #{message_with_edge.1} parent=5 // pred_check
        _
      $region10: #{message_with_edge.1} parent=5 // pred_check_branch
        %165 = sbr.rel (%p162) target = $region12
      $region11: #{message_with_edge.1} parent=5 // pred_region
        %s166 = ssub.s32 %s11, 1
        // Predicated region
        $region13: #{message_with_edge.1} parent=11 // pred_check
          %p167 = pneg %p84
        $region14: #{message_with_edge.1} parent=11 // pred_check_branch
          %169 = sbr.rel (%p167) target = $region16
        $region15: #{message_with_edge.1} parent=11 // pred_region
          _
        $region16: #{message_with_edge.1} parent=11 // pred_fallthru
          _
        // Predicated region
        $region17: #{message_with_edge.1} parent=11 // pred_check
          %p170 = pneg %p105
        $region18: #{message_with_edge.1} parent=11 // pred_check_branch
          %172 = sbr.rel (%p170) target = $region20
        $region19: #{message_with_edge.1} parent=11 // pred_region
          _
        $region20: #{message_with_edge.1} parent=11 // pred_fallthru
          _
        // Predicated region
        $region21: #{message_with_edge.1} parent=11 // pred_check
          %p173 = pneg %p126
        $region22: #{message_with_edge.1} parent=11 // pred_check_branch
          %175 = sbr.rel (%p173) target = $region24
        $region23: #{message_with_edge.1} parent=11 // pred_region
          _
        $region24: #{message_with_edge.1} parent=11 // pred_fallthru
          _
      $region12: #{message_with_edge.1} parent=5 // pred_fallthru
        _
      %p176 = scmp.lt.s32.totalorder %s11, 2
      // Predicated region
      $region25: #{message_with_edge.1} parent=5 // pred_check
        %p177 = pneg %p176
      $region26: #{message_with_edge.1} parent=5 // pred_check_branch
        %179 = sbr.rel (%p177) target = $region28
      $region27: #{message_with_edge.1} parent=5 // pred_region
        // Predicated region
        $region29: #{message_with_edge.1} parent=27 // pred_check
          %p180 = pneg %p31
        $region30: #{message_with_edge.1} parent=27 // pred_check_branch
          %182 = sbr.rel (%p180) target = $region32
        $region31: #{message_with_edge.1} parent=27 // pred_region
          %s183 = smul.u32 10, %s11
          %s184 = ssub.s32 17, %s183
          %p185 = scmp.lt.s32.totalorder %s184, 10
          %s186 = scalar_select %p185, %s184, 10
          %s187 = smul.u32 128, %s186
          %p188 = scmp.lt.s32.totalorder %s183, 16
          %s189 = scalar_select %p188, %s183, 16
          %s190 = smul.addr %s189, 8
          %s191 = scalar_lea.vmem %s0, %s190
          %s192 = smul.u32 10, %s11
          %s193 = ssub.s32 17, %s192
          %p194 = scmp.lt.s32.totalorder %s193, 10
          %s195 = scalar_select %p194, %s193, 10
          %s196 = smul.u32 128, %s195
        $region32: #{message_with_edge.1} parent=27 // pred_fallthru
          _
        // Predicated region
        $region33: #{message_with_edge.1} parent=27 // pred_check
          %p197 = pneg %p57
        $region34: #{message_with_edge.1} parent=27 // pred_check_branch
          %199 = sbr.rel (%p197) target = $region36
        $region35: #{message_with_edge.1} parent=27 // pred_region
          %s200 = smul.u32 10, %s11
          %s201 = ssub.s32 17, %s200
          %p202 = scmp.lt.s32.totalorder %s201, 10
          %s203 = scalar_select %p202, %s201, 10
          %s204 = smul.u32 128, %s203
          %p205 = scmp.lt.s32.totalorder %s200, 16
          %s206 = scalar_select %p205, %s200, 16
          %s207 = smul.addr %s206, 8
          %s208 = scalar_lea.vmem %s1, %s207
          %s209 = smul.u32 10, %s11
          %s210 = ssub.s32 17, %s209
          %p211 = scmp.lt.s32.totalorder %s210, 10
          %s212 = scalar_select %p211, %s210, 10
          %s213 = smul.u32 128, %s212
        $region36: #{message_with_edge.1} parent=27 // pred_fallthru
          _
      $region28: #{message_with_edge.1} parent=5 // pred_fallthru
        _
      %p214 = scmp.le.s32.totalorder 1, %s11
      %p215 = scmp.lt.s32.totalorder %s11, 3
      %p216 = pnand %p214, %p215
      %p217 = pneg %p216
      // Predicated region
      $region37: #{message_with_edge.1} parent=5 // pred_check
        _
      $region38: #{message_with_edge.1} parent=5 // pred_check_branch
        %219 = sbr.rel (%p216) target = $region40
      $region39: #{message_with_edge.1} parent=5 // pred_region
        %s220 = ssub.s32 %s11, 1
        %s221 = smul.u32 10, %s16
        %s222 = ssub.s32 17, %s221
        %p223 = scmp.lt.s32.totalorder %s222, 10
        %s224 = scalar_select %p223, %s222, 10
        %s225 = smul.u32 128, %s224
        %p226 = scmp.lt.s32.totalorder %s221, 16
        %s227 = scalar_select %p226, %s221, 16
        %s228 = smul.addr %s227, 8
        %s229 = scalar_lea.vmem %s0, %s228
        %p230 = pneg %p37
        %p231 = pneg %p34
        %s232 = smul.u32 10, %s16
        %s233 = ssub.s32 17, %s232
        %p234 = scmp.lt.s32.totalorder %s233, 10
        %s235 = scalar_select %p234, %s233, 10
        %s236 = smul.u32 128, %s235
        %p237 = scmp.lt.s32.totalorder %s232, 16
        %s238 = scalar_select %p237, %s232, 16
        %s239 = smul.addr %s238, 8
        %s240 = scalar_lea.vmem %s1, %s239
        %p241 = pneg %p63
        %p242 = pneg %p60
        %p243 = pneg %p84
        %p244 = pneg %p81
        %p245 = pneg %p105
        %p246 = pneg %p102
        %p247 = pneg %p126
        %p248 = pneg %p123
        %p249 = pneg %p152
        %p250 = pneg %p149
        %s251 = sand.u32 %s139, 1
        %s252 = sand.u32 %s139, 1
        %s253 = smul.addr %s252, 80
        %s254 = scalar_lea.vmem [#allocation2], %s253
        %s255 = smul.u32 10, %s16
        %s256 = ssub.s32 17, %s255
        %p257 = scmp.lt.s32.totalorder %s256, 10
        %s258 = scalar_select %p257, %s256, 10
        %s259 = smul.u32 128, %s258
        %p260 = scmp.lt.s32.totalorder %s255, 16
        %s261 = scalar_select %p260, %s255, 16
        %s262 = smul.addr %s261, 8
        %s263 = scalar_lea.vmem %s0, %s262
        %s264 = smul.u32 10, %s16
        %s265 = ssub.s32 17, %s264
        %p266 = scmp.lt.s32.totalorder %s265, 10
        %s267 = scalar_select %p266, %s265, 10
        %s268 = smul.u32 128, %s267
        %s269 = smul.u32 10, %s16
        %s270 = ssub.s32 17, %s269
        %p271 = scmp.lt.s32.totalorder %s270, 10
        %s272 = scalar_select %p271, %s270, 10
        %s273 = smul.u32 128, %s272
        %p274 = scmp.lt.s32.totalorder %s269, 16
        %s275 = scalar_select %p274, %s269, 16
        %s276 = smul.addr %s275, 8
        %s277 = scalar_lea.vmem %s1, %s276
        %s278 = smul.u32 10, %s16
        %s279 = ssub.s32 17, %s278
        %p280 = scmp.lt.s32.totalorder %s279, 10
        %s281 = scalar_select %p280, %s279, 10
        %s282 = smul.u32 128, %s281
        %s283 = smul.u32 10, %s16
        %s284 = ssub.s32 17, %s283
        %p285 = scmp.lt.s32.totalorder %s284, 10
        %s286 = scalar_select %p285, %s284, 10
        %s287 = smul.u32 128, %s286
        %v289 = vld [vmem:[%s263] sm:$0xff]
        %v290 = vld [vmem:[%s263 + $0x8] sm:$0xff]
        %v291 = vld [vmem:[%s263 + $0x10] sm:$0xff]
        %v292 = vld [vmem:[%s263 + $0x18] sm:$0xff]
        %v293 = vld [vmem:[%s263 + $0x20] sm:$0xff]
        %v294 = vld [vmem:[%s263 + $0x28] sm:$0xff]
        %v295 = vld [vmem:[%s263 + $0x30] sm:$0xff]
        %v296 = vld [vmem:[%s263 + $0x38] sm:$0xff]
        %v297 = vld [vmem:[%s263 + $0x40] sm:$0xff]
        %v298 = vld [vmem:[%s263 + $0x48] sm:$0xff]
        %v299 = vpack.c.bf16 %v290, %v289
        %v300 = vpack.c.bf16 %v292, %v291
        %v301 = vpack.c.bf16 %v294, %v293
        %v302 = vpack.c.bf16 %v296, %v295
        %v303 = vpack.c.bf16 %v298, %v297
        %v304 = vld [vmem:[%s277] sm:$0xff]
        %v305 = vld [vmem:[%s277 + $0x8] sm:$0xff]
        %v306 = vld [vmem:[%s277 + $0x10] sm:$0xff]
        %v307 = vld [vmem:[%s277 + $0x18] sm:$0xff]
        %v308 = vld [vmem:[%s277 + $0x20] sm:$0xff]
        %v309 = vld [vmem:[%s277 + $0x28] sm:$0xff]
        %v310 = vld [vmem:[%s277 + $0x30] sm:$0xff]
        %v311 = vld [vmem:[%s277 + $0x38] sm:$0xff]
        %v312 = vld [vmem:[%s277 + $0x40] sm:$0xff]
        %v313 = vld [vmem:[%s277 + $0x48] sm:$0xff]
        %v314 = vpack.c.bf16 %v305, %v304
        %v315 = vpack.c.bf16 %v307, %v306
        %v316 = vpack.c.bf16 %v309, %v308
        %v317 = vpack.c.bf16 %v311, %v310
        %v318 = vpack.c.bf16 %v313, %v312
        %v319 = vld [vmem:[%s2] sm:$0xf]
        %v320 = vld [vmem:[%s2 + $0x4] sm:$0xf]
        %v321 = vld [vmem:[%s2 + $0x8] sm:$0xf]
        %v322 = vld [vmem:[%s2 + $0xc] sm:$0xf]
        %v323 = vld [vmem:[%s3] sm:$0xf]
        %vm324 = vcmask 64512
        %v326 = vsel %vm324, %v314, 0
        %v329 = vsel %vm324, %v315, 0
        %v332 = vsel %vm324, %v316, 0
        %v335 = vsel %vm324, %v317, 0
        %v338 = vsel %vm324, %v318, 0
        %vm340 = vcmask 1043456
        %v342 = vsel %vm340, %v323, 0
        %344 = vmatprep.subr.bf16.mxu0 0
        %345 = vmatpush1.bf16.msra.mxu0 %v342
        %346 = vmatprep.subr.bf16.mxu0 0
        %347 = vmatpush1.bf16.msra.mxu0 0
        %348 = vmatprep.subr.bf16.mxu0 0
        %349 = vmatpush1.bf16.msra.mxu0 0
        %350 = vmatprep.subr.bf16.mxu0 0
        %351 = vmatpush1.bf16.msra.mxu0 0
        %352 = vmatprep.subr.bf16.mxu0 0
        %353 = vmatpush1.bf16.msra.mxu0 0
        %354 = vmatprep.subr.bf16.mxu0 0
        %355 = vmatpush1.bf16.msra.mxu0 0
        %356 = vmatprep.subr.bf16.mxu0 0
        %357 = vmatpush1.bf16.msra.mxu0 0
        %358 = vmatprep.subr.bf16.mxu0 0
        %359 = vmatpush1.bf16.msra.mxu0 0
        %360 = vmatprep.subr.bf16.mxu0 0
        %361 = vmatpush1.bf16.msra.mxu0 0
        %362 = vmatprep.subr.bf16.mxu0 0
        %363 = vmatpush1.bf16.msra.mxu0 0
        %364 = vmatprep.subr.bf16.mxu0 0
        %365 = vmatpush1.bf16.msra.mxu0 0
        %366 = vmatprep.subr.bf16.mxu0 0
        %367 = vmatpush1.bf16.msra.mxu0 0
        %368 = vmatprep.subr.bf16.mxu0 0
        %369 = vmatpush1.bf16.msra.mxu0 0
        %370 = vmatprep.subr.bf16.mxu0 0
        %371 = vmatpush1.bf16.msra.mxu0 0
        %372 = vmatprep.subr.bf16.mxu0 0
        %373 = vmatpush1.bf16.msra.mxu0 0
        %374 = vmatprep.subr.bf16.mxu0 0
        %375 = vmatpush1.bf16.msra.mxu0 0
        %376 = vmatprep.mubr.bf16.mxu0 0
        %377 = vmatmul.mubr.bf16.gmra.mrb[0].mxu0 %v326
        %v378 = vpop.f32.mrb[0].mxu0
        %v379 = vadd.f32 0.0, %v378
        %v380 = vpop.f32.mrb[0].mxu0
        %v381 = vpop.f32.mrb[0].mxu0
        %v382 = vadd.f32 0.0, %v381
        %v383 = vpop.f32.mrb[0].mxu0
        %384 = vmatprep.mubr.bf16.mxu0 0
        %385 = vmatmul.mubr.bf16.gmra.mrb[0].mxu0 %v329
        %v386 = vpop.f32.mrb[0].mxu0
        %v387 = vadd.f32 0.0, %v386
        %v388 = vpop.f32.mrb[0].mxu0
        %v389 = vpop.f32.mrb[0].mxu0
        %v390 = vadd.f32 0.0, %v389
        %v391 = vpop.f32.mrb[0].mxu0
        %392 = vmatprep.mubr.bf16.mxu0 0
        %393 = vmatmul.mubr.bf16.gmra.mrb[0].mxu0 %v332
        %v394 = vpop.f32.mrb[0].mxu0
        %v395 = vadd.f32 0.0, %v394
        %v396 = vpop.f32.mrb[0].mxu0
        %v397 = vpop.f32.mrb[0].mxu0
        %v398 = vadd.f32 0.0, %v397
        %v399 = vpop.f32.mrb[0].mxu0
        %400 = vmatprep.mubr.bf16.mxu0 0
        %401 = vmatmul.mubr.bf16.gmra.mrb[0].mxu0 %v335
        %v402 = vpop.f32.mrb[0].mxu0
        %v403 = vadd.f32 0.0, %v402
        %v404 = vpop.f32.mrb[0].mxu0
        %v405 = vpop.f32.mrb[0].mxu0
        %v406 = vadd.f32 0.0, %v405
        %v407 = vpop.f32.mrb[0].mxu0
        %408 = vmatprep.mubr.bf16.mxu0 0
        %409 = vmatmul.mubr.bf16.gmra.mrb[0].mxu0 %v338
        %v410 = vpop.f32.mrb[0].mxu0
        %v411 = vadd.f32 0.0, %v410
        %v412 = vpop.f32.mrb[0].mxu0
        %v413 = vpop.f32.mrb[0].mxu0
        %v414 = vadd.f32 0.0, %v413
        %v415 = vpop.f32.mrb[0].mxu0
        %416 = vdwg.mxu0
        %v421 = vunpack.c.l.b16 %v319
        %v422 = vunpack.c.l.b16 %v320
        %v423 = vunpack.c.l.b16 %v321
        %v424 = vunpack.c.l.b16 %v322
        %v425 = vpack.c.b16 %v422, %v421
        %v426 = vpack.c.b16 %v424, %v423
        %vm429 = vcmask 261120
        %v431 = vsel %vm429, %v299, 0
        %v434 = vsel %vm429, %v300, 0
        %v437 = vsel %vm429, %v301, 0
        %v440 = vsel %vm429, %v302, 0
        %v443 = vsel %vm429, %v303, 0
        %445 = vmatprep.subr.bf16.mxu0 0
        %446 = vmatpush1.bf16.msra.mxu0 %v425
        %447 = vmatprep.subr.bf16.mxu0 0
        %448 = vmatpush1.bf16.msra.mxu0 %v426
        %449 = vmatprep.subr.bf16.mxu0 0
        %450 = vmatpush1.bf16.msra.mxu0 0
        %451 = vmatprep.subr.bf16.mxu0 0
        %452 = vmatpush1.bf16.msra.mxu0 0
        %453 = vmatprep.subr.bf16.mxu0 0
        %454 = vmatpush1.bf16.msra.mxu0 0
        %455 = vmatprep.subr.bf16.mxu0 0
        %456 = vmatpush1.bf16.msra.mxu0 0
        %457 = vmatprep.subr.bf16.mxu0 0
        %458 = vmatpush1.bf16.msra.mxu0 0
        %459 = vmatprep.subr.bf16.mxu0 0
        %460 = vmatpush1.bf16.msra.mxu0 0
        %461 = vmatprep.subr.bf16.mxu0 0
        %462 = vmatpush1.bf16.msra.mxu0 0
        %463 = vmatprep.subr.bf16.mxu0 0
        %464 = vmatpush1.bf16.msra.mxu0 0
        %465 = vmatprep.subr.bf16.mxu0 0
        %466 = vmatpush1.bf16.msra.mxu0 0
        %467 = vmatprep.subr.bf16.mxu0 0
        %468 = vmatpush1.bf16.msra.mxu0 0
        %469 = vmatprep.subr.bf16.mxu0 0
        %470 = vmatpush1.bf16.msra.mxu0 0
        %471 = vmatprep.subr.bf16.mxu0 0
        %472 = vmatpush1.bf16.msra.mxu0 0
        %473 = vmatprep.subr.bf16.mxu0 0
        %474 = vmatpush1.bf16.msra.mxu0 0
        %475 = vmatprep.subr.bf16.mxu0 0
        %476 = vmatpush1.bf16.msra.mxu0 0
        %477 = vmatprep.mubr.bf16.mxu0 0
        %478 = vmatmul.mubr.bf16.gmra.mrb[0].mxu0 %v431
        %v479 = vpop.f32.mrb[0].mxu0
        %v480 = vadd.f32 %v379, %v479
        %v481 = vpop.f32.mrb[0].mxu0
        %v482 = vpop.f32.mrb[0].mxu0
        %v483 = vadd.f32 %v382, %v482
        %v484 = vpop.f32.mrb[0].mxu0
        %485 = vmatprep.mubr.bf16.mxu0 0
        %486 = vmatmul.mubr.bf16.gmra.mrb[0].mxu0 %v434
        %v487 = vpop.f32.mrb[0].mxu0
        %v488 = vadd.f32 %v387, %v487
        %v489 = vpop.f32.mrb[0].mxu0
        %v490 = vpop.f32.mrb[0].mxu0
        %v491 = vadd.f32 %v390, %v490
        %v492 = vpop.f32.mrb[0].mxu0
        %493 = vmatprep.mubr.bf16.mxu0 0
        %494 = vmatmul.mubr.bf16.gmra.mrb[0].mxu0 %v437
        %v495 = vpop.f32.mrb[0].mxu0
        %v496 = vadd.f32 %v395, %v495
        %v497 = vpop.f32.mrb[0].mxu0
        %v498 = vpop.f32.mrb[0].mxu0
        %v499 = vadd.f32 %v398, %v498
        %v500 = vpop.f32.mrb[0].mxu0
        %501 = vmatprep.mubr.bf16.mxu0 0
        %502 = vmatmul.mubr.bf16.gmra.mrb[0].mxu0 %v440
        %v503 = vpop.f32.mrb[0].mxu0
        %v504 = vadd.f32 %v403, %v503
        %v505 = vpop.f32.mrb[0].mxu0
        %v506 = vpop.f32.mrb[0].mxu0
        %v507 = vadd.f32 %v406, %v506
        %v508 = vpop.f32.mrb[0].mxu0
        %509 = vmatprep.mubr.bf16.mxu0 0
        %510 = vmatmul.mubr.bf16.gmra.mrb[0].mxu0 %v443
        %v511 = vpop.f32.mrb[0].mxu0
        %v512 = vadd.f32 %v411, %v511
        %v513 = vpop.f32.mrb[0].mxu0
        %v514 = vpop.f32.mrb[0].mxu0
        %v515 = vadd.f32 %v414, %v514
        %v516 = vpop.f32.mrb[0].mxu0
        %517 = vdwg.mxu0
        %v518 = vld [vmem:[%s4] sm:$0x1]
        %v520 = vlaneseq
        %v521 = vshrl.u32 %v520, 7
        %v522 = vsub.s32 0, %v521
        %v523 = vrot.slane %v518, %v522
        %v525 = vadd.f32 %v480, %v523
        %v526 = vadd.f32 %v483, %v523
        %v527 = vadd.f32 %v488, %v523
        %v528 = vadd.f32 %v491, %v523
        %v529 = vadd.f32 %v496, %v523
        %v530 = vadd.f32 %v499, %v523
        %v531 = vadd.f32 %v504, %v523
        %v532 = vadd.f32 %v507, %v523
        %v533 = vadd.f32 %v512, %v523
        %v534 = vadd.f32 %v515, %v523
        %v535 = vmax.f32 %v525, 0.0
        %v536 = vmax.f32 %v526, 0.0
        %v537 = vmax.f32 %v527, 0.0
        %v538 = vmax.f32 %v528, 0.0
        %v539 = vmax.f32 %v529, 0.0
        %v540 = vmax.f32 %v530, 0.0
        %v541 = vmax.f32 %v531, 0.0
        %v542 = vmax.f32 %v532, 0.0
        %v543 = vmax.f32 %v533, 0.0
        %v544 = vmax.f32 %v534, 0.0
        %545 = vst.msk [vmem:[%s254] sm:$0xff] %vm429, %v535
        %546 = vst.msk [vmem:[%s254 + $0x8] sm:$0xff] %vm429, %v536
        %547 = vst.msk [vmem:[%s254 + $0x10] sm:$0xff] %vm429, %v537
        %548 = vst.msk [vmem:[%s254 + $0x18] sm:$0xff] %vm429, %v538
        %549 = vst.msk [vmem:[%s254 + $0x20] sm:$0xff] %vm429, %v539
        %550 = vst.msk [vmem:[%s254 + $0x28] sm:$0xff] %vm429, %v540
        %551 = vst.msk [vmem:[%s254 + $0x30] sm:$0xff] %vm429, %v541
        %552 = vst.msk [vmem:[%s254 + $0x38] sm:$0xff] %vm429, %v542
        %553 = vst.msk [vmem:[%s254 + $0x40] sm:$0xff] %vm429, %v543
        %554 = vst.msk [vmem:[%s254 + $0x48] sm:$0xff] %vm429, %v544
        %s555 = sand.u32 %s139, 1
        %s556 = sand.u32 %s139, 1
        %s557 = smul.addr %s556, 80
        %s558 = scalar_lea.vmem [#allocation2], %s557
        // Predicated region
        $region41: #{message_with_edge.1} parent=39 // pred_check
          %p559 = pneg %p149
        $region42: #{message_with_edge.1} parent=39 // pred_check_branch
          %561 = sbr.rel (%p559) target = $region44
        $region43: #{message_with_edge.1} parent=39 // pred_region
          %s562 = smul.u32 10, %s16
          %s563 = ssub.s32 17, %s562
          %p564 = scmp.lt.s32.totalorder %s563, 10
          %s565 = scalar_select %p564, %s563, 10
          %s566 = smul.u32 128, %s565
          %p567 = scmp.ne.s32.totalorder 0, %s566
          %s568 = smul.addr %s562, 8
          %s569 = scalar_lea.vmem %s5, %s568
          // Predicated region
          $region45: #{message_with_edge.1} parent=43 // pred_check
            %p570 = pneg %p567
          $region46: #{message_with_edge.1} parent=43 // pred_check_branch
            %572 = sbr.rel (%p570) target = $region48
          $region47: #{message_with_edge.1} parent=43 // pred_region
            // Predicated region
            $region49: #{message_with_edge.1} parent=47 // pred_check
              _
            $region50: #{message_with_edge.1} parent=47 // pred_check_branch
              %574 = sbr.rel (0) target = $region52
            $region51: #{message_with_edge.1} parent=47 // pred_region
              // Predicated region
              $region71: #{message_with_edge.1} parent=51 // pred_check
                _
              $region72: #{message_with_edge.1} parent=51 // pred_check_branch
                %642 = sbr.rel (0) target = $region74
              $region73: #{message_with_edge.1} parent=51 // pred_region
                %s643 = sdiv.u32.pop %s565, 10
                %s644 = srem.u32.pop %s565, 10
                // While loop
                $region75: #{message_with_edge.1} parent=73 // loop_pre_header
                  _
                $region76: #{message_with_edge.1} parent=73 // loop_header
                  %s646 = sphi 0, %s648
                  %p647 = scmp.ge.s32.totalorder %s646, %s643
                  %s651 = sphi 0, %s676
                  %s652 = sphi %s558, %s679
                  %s653 = sphi %s569, %s680
                $region77: #{message_with_edge.1} parent=73 // loop_header_branch
                  %650 = sbr.rel (%p647) target = $region81
                $region78: #{message_with_edge.1} parent=73 // loop_body
                  %v654 = vld [vmem:[%s652] sm:$0xff]
                  %655 = vst [vmem:[%s653] sm:$0xff] %v654
                  %v656 = vld [vmem:[%s652 + $0x8] sm:$0xff]
                  %657 = vst [vmem:[%s653 + $0x8] sm:$0xff] %v656
                  %v658 = vld [vmem:[%s652 + $0x10] sm:$0xff]
                  %659 = vst [vmem:[%s653 + $0x10] sm:$0xff] %v658
                  %v660 = vld [vmem:[%s652 + $0x18] sm:$0xff]
                  %661 = vst [vmem:[%s653 + $0x18] sm:$0xff] %v660
                  %v662 = vld [vmem:[%s652 + $0x20] sm:$0xff]
                  %663 = vst [vmem:[%s653 + $0x20] sm:$0xff] %v662
                  %v664 = vld [vmem:[%s652 + $0x28] sm:$0xff]
                  %665 = vst [vmem:[%s653 + $0x28] sm:$0xff] %v664
                  %v666 = vld [vmem:[%s652 + $0x30] sm:$0xff]
                  %667 = vst [vmem:[%s653 + $0x30] sm:$0xff] %v666
                  %v668 = vld [vmem:[%s652 + $0x38] sm:$0xff]
                  %669 = vst [vmem:[%s653 + $0x38] sm:$0xff] %v668
                  %v670 = vld [vmem:[%s652 + $0x40] sm:$0xff]
                  %671 = vst [vmem:[%s653 + $0x40] sm:$0xff] %v670
                  %v672 = vld [vmem:[%s652 + $0x48] sm:$0xff]
                  %673 = vst [vmem:[%s653 + $0x48] sm:$0xff] %v672
                  %s674 = sadd.s32 1, %s651
                  %p675 = scmp.ge.s32.totalorder %s674, %s643
                  %s676 = scalar_select %p675, 0, %s674
                  %s677 = smul.u32 %s676, 80
                  %s678 = smul.u32 %s676, 80
                  %s679 = scalar_lea.vmem %s558, %s677 [#allocation2]
                  %s680 = scalar_lea.vmem %s569, %s678
                $region79: #{message_with_edge.1} parent=73 // loop_footer
                  %s648 = sadd.s32 %s646, 1
                $region80: #{message_with_edge.1} parent=73 // loop_footer_branch
                  %645 = sbr.rel target = $region76
                $region81: #{message_with_edge.1} parent=73 // loop_exit
                  _
                %s681 = sdiv.u32.pop %s565, 10
                %s682 = srem.u32.pop %s565, 10
                %s683 = smul.u32 %s681, 10
                %s684 = smul.u32 8, %s683
                %s685 = scalar_lea.vmem %s558, %s684 [#allocation2]
                %s686 = smul.u32 8, %s683
                %s687 = scalar_lea.vmem %s569, %s686
                // While loop
                $region82: #{message_with_edge.1} parent=73 // loop_pre_header
                  _
                $region83: #{message_with_edge.1} parent=73 // loop_header
                  %s689 = sphi 0, %s691
                  %p690 = scmp.ge.s32.totalorder %s689, %s682
                  %s694 = sphi 0, %s701
                  %s695 = sphi %s685, %s704
                  %s696 = sphi %s687, %s705
                $region84: #{message_with_edge.1} parent=73 // loop_header_branch
                  %693 = sbr.rel (%p690) target = $region88
                $region85: #{message_with_edge.1} parent=73 // loop_body
                  %v697 = vld [vmem:[%s695] sm:$0xff]
                  %698 = vst [vmem:[%s696] sm:$0xff] %v697
                  %s699 = sadd.s32 1, %s694
                  %p700 = scmp.ge.s32.totalorder %s699, %s682
                  %s701 = scalar_select %p700, 0, %s699
                  %s702 = smul.u32 %s701, 8
                  %s703 = smul.u32 %s701, 8
                  %s704 = scalar_lea.vmem %s685, %s702 [#allocation2]
                  %s705 = scalar_lea.vmem %s687, %s703
                $region86: #{message_with_edge.1} parent=73 // loop_footer
                  %s691 = sadd.s32 %s689, 1
                $region87: #{message_with_edge.1} parent=73 // loop_footer_branch
                  %688 = sbr.rel target = $region83
                $region88: #{message_with_edge.1} parent=73 // loop_exit
                  _
              $region74: #{message_with_edge.1} parent=51 // pred_fallthru
                _
              // Predicated region
              $region89: #{message_with_edge.1} parent=51 // pred_check
                _
              $region90: #{message_with_edge.1} parent=51 // pred_check_branch
                %707 = sbr.rel target = $region92
              $region91: #{message_with_edge.1} parent=51 // pred_region
                _
              $region92: #{message_with_edge.1} parent=51 // pred_fallthru
                _
            $region52: #{message_with_edge.1} parent=47 // pred_fallthru
              _
            // Predicated region
            $region53: #{message_with_edge.1} parent=47 // pred_check
              _
            $region54: #{message_with_edge.1} parent=47 // pred_check_branch
              %576 = sbr.rel target = $region56
            $region55: #{message_with_edge.1} parent=47 // pred_region
              %s578 = sdiv.u32.pop %s565, 10
              %s579 = srem.u32.pop %s565, 10
              // While loop
              $region57: #{message_with_edge.1} parent=55 // loop_pre_header
                _
              $region58: #{message_with_edge.1} parent=55 // loop_header
                %s581 = sphi 0, %s583
                %p582 = scmp.ge.s32.totalorder %s581, %s578
                %s586 = sphi 0, %s611
                %s587 = sphi %s558, %s614
                %s588 = sphi %s569, %s615
              $region59: #{message_with_edge.1} parent=55 // loop_header_branch
                %585 = sbr.rel (%p582) target = $region63
              $region60: #{message_with_edge.1} parent=55 // loop_body
                %v589 = vld [vmem:[%s587] sm:$0xff]
                %590 = vst [vmem:[%s588] sm:$0xff] %v589
                %v591 = vld [vmem:[%s587 + $0x8] sm:$0xff]
                %592 = vst [vmem:[%s588 + $0x8] sm:$0xff] %v591
                %v593 = vld [vmem:[%s587 + $0x10] sm:$0xff]
                %594 = vst [vmem:[%s588 + $0x10] sm:$0xff] %v593
                %v595 = vld [vmem:[%s587 + $0x18] sm:$0xff]
                %596 = vst [vmem:[%s588 + $0x18] sm:$0xff] %v595
                %v597 = vld [vmem:[%s587 + $0x20] sm:$0xff]
                %598 = vst [vmem:[%s588 + $0x20] sm:$0xff] %v597
                %v599 = vld [vmem:[%s587 + $0x28] sm:$0xff]
                %600 = vst [vmem:[%s588 + $0x28] sm:$0xff] %v599
                %v601 = vld [vmem:[%s587 + $0x30] sm:$0xff]
                %602 = vst [vmem:[%s588 + $0x30] sm:$0xff] %v601
                %v603 = vld [vmem:[%s587 + $0x38] sm:$0xff]
                %604 = vst [vmem:[%s588 + $0x38] sm:$0xff] %v603
                %v605 = vld [vmem:[%s587 + $0x40] sm:$0xff]
                %606 = vst [vmem:[%s588 + $0x40] sm:$0xff] %v605
                %v607 = vld [vmem:[%s587 + $0x48] sm:$0xff]
                %608 = vst [vmem:[%s588 + $0x48] sm:$0xff] %v607
                %s609 = sadd.s32 1, %s586
                %p610 = scmp.ge.s32.totalorder %s609, %s578
                %s611 = scalar_select %p610, 0, %s609
                %s612 = smul.u32 %s611, 80
                %s613 = smul.u32 %s611, 80
                %s614 = scalar_lea.vmem %s558, %s612 [#allocation2]
                %s615 = scalar_lea.vmem %s569, %s613
              $region61: #{message_with_edge.1} parent=55 // loop_footer
                %s583 = sadd.s32 %s581, 1
              $region62: #{message_with_edge.1} parent=55 // loop_footer_branch
                %580 = sbr.rel target = $region58
              $region63: #{message_with_edge.1} parent=55 // loop_exit
                _
              %s616 = sdiv.u32.pop %s565, 10
              %s617 = srem.u32.pop %s565, 10
              %s618 = smul.u32 %s616, 10
              %s619 = smul.u32 8, %s618
              %s620 = scalar_lea.vmem %s558, %s619 [#allocation2]
              %s621 = smul.u32 8, %s618
              %s622 = scalar_lea.vmem %s569, %s621
              // While loop
              $region64: #{message_with_edge.1} parent=55 // loop_pre_header
                _
              $region65: #{message_with_edge.1} parent=55 // loop_header
                %s624 = sphi 0, %s626
                %p625 = scmp.ge.s32.totalorder %s624, %s617
                %s629 = sphi 0, %s636
                %s630 = sphi %s620, %s639
                %s631 = sphi %s622, %s640
              $region66: #{message_with_edge.1} parent=55 // loop_header_branch
                %628 = sbr.rel (%p625) target = $region70
              $region67: #{message_with_edge.1} parent=55 // loop_body
                %v632 = vld [vmem:[%s630] sm:$0xff]
                %633 = vst [vmem:[%s631] sm:$0xff] %v632
                %s634 = sadd.s32 1, %s629
                %p635 = scmp.ge.s32.totalorder %s634, %s617
                %s636 = scalar_select %p635, 0, %s634
                %s637 = smul.u32 %s636, 8
                %s638 = smul.u32 %s636, 8
                %s639 = scalar_lea.vmem %s620, %s637 [#allocation2]
                %s640 = scalar_lea.vmem %s622, %s638
              $region68: #{message_with_edge.1} parent=55 // loop_footer
                %s626 = sadd.s32 %s624, 1
              $region69: #{message_with_edge.1} parent=55 // loop_footer_branch
                %623 = sbr.rel target = $region65
              $region70: #{message_with_edge.1} parent=55 // loop_exit
                _
            $region56: #{message_with_edge.1} parent=47 // pred_fallthru
              _
          $region48: #{message_with_edge.1} parent=43 // pred_fallthru
            _
          %708 = vnop
        $region44: #{message_with_edge.1} parent=39 // pred_fallthru
          _
      $region40: #{message_with_edge.1} parent=5 // pred_fallthru
        _
      %p709 = scmp.le.s32.totalorder 2, %s11
      // Predicated region
      $region93: #{message_with_edge.1} parent=5 // pred_check
        %p710 = pneg %p709
      $region94: #{message_with_edge.1} parent=5 // pred_check_branch
        %712 = sbr.rel (%p710) target = $region96
      $region95: #{message_with_edge.1} parent=5 // pred_region
        %s713 = ssub.s32 %s11, 2
        // Predicated region
        $region97: #{message_with_edge.1} parent=95 // pred_check
          %p714 = pneg %p155
        $region98: #{message_with_edge.1} parent=95 // pred_check_branch
          %716 = sbr.rel (%p714) target = $region100
        $region99: #{message_with_edge.1} parent=95 // pred_region
          %s717 = sand.u32 %s140, 1
          %s718 = sand.u32 %s140, 1
          %s719 = smul.addr %s718, 80
          %s720 = scalar_lea.vmem [#allocation2], %s719
        $region100: #{message_with_edge.1} parent=95 // pred_fallthru
          _
      $region96: #{message_with_edge.1} parent=5 // pred_fallthru
        _
    $region6: #{message_with_edge.1} parent=1 // loop_footer
      %s15 = sadd.s32 1, %s11
    $region7: #{message_with_edge.1} parent=1 // loop_footer_branch
      %10 = sbr.rel target = $region3
    $region8: #{message_with_edge.1} parent=1 // loop_exit
      _

</llo_original>
